<compile_context>
chip_gen: v5e
topology: v5e:2x2
jax: 0.10.0
libtpu: 0.0.40
codegen_flags: <defaults>
</compile_context>

<pallas_src>
import jax
import jax.numpy as jnp
from jax.experimental import pallas as pl
from jax.experimental.pallas import tpu as pltpu


_IN = 5
_OUT = 4

# Lane-dense batch tile: an (IN->8 sublane, 32768 lane) f32 slab is ~1 MiB.
_BATCH_TILE = 32768


def _affine_lane_dense_kernel(xT_ref, w_ref, b_ref, oT_ref):
    """y^T = W @ x^T + b, unrolled over the tiny static contraction dim.

    Lane-dense: batch on the 128-lane (minor) axis.
      xT_ref: (IN, B_tile)  w_ref: (OUT, IN)  b_ref: (OUT, 1)  oT_ref: (OUT, B_tile)
    """
    xT = xT_ref[...].astype(jnp.float32)
    w = w_ref[...].astype(jnp.float32)
    # Bias is the accumulator init (no separate add); broadcast hoisted once.
    acc = jnp.broadcast_to(b_ref[...].astype(jnp.float32), oT_ref.shape)
    for k in range(xT_ref.shape[0]):          # static unroll, IN == 5
        # (OUT, 1) weight column * (1, B_tile) activation row -> pure VPU FMAs.
        acc = acc + w[:, k:k + 1] * xT[k:k + 1, :]
    oT_ref[...] = acc.astype(oT_ref.dtype)


def ctrler_forward_T(xT, w, b_col):
    """Lane-dense forward: xT (IN, B) -> yT (OUT, B), yT = W @ xT + b."""
    IN, B = xT.shape
    OUT = w.shape[0]

    if B <= _BATCH_TILE:
        # Small/medium batch: grid-less, whole arrays resident in VMEM
        # (<= ~2 MiB at the tile ceiling), no pipeline scaffolding.
        vmem = pltpu.MemorySpace.VMEM
        return pl.pallas_call(
            _affine_lane_dense_kernel,
            out_shape=jax.ShapeDtypeStruct((OUT, B), xT.dtype),
            in_specs=[pl.BlockSpec(memory_space=vmem)] * 3,
            out_specs=pl.BlockSpec(memory_space=vmem),
        )(xT, w, b_col)

    # Large batch: tile the lane (batch) axis; pad to a tile multiple so an
    # odd B never falls back to a whole-array-in-VMEM path (VMEM blowup risk
    # on v7x's 64 MiB / v5e's 16 MiB scoped default).
    n_tiles = pl.cdiv(B, _BATCH_TILE)
    B_pad = n_tiles * _BATCH_TILE
    if B_pad != B:
        xT = jnp.pad(xT, ((0, 0), (0, B_pad - B)))

    elem = jnp.dtype(xT.dtype).itemsize
    cost = pl.CostEstimate(
        flops=2 * IN * OUT * B_pad,
        transcendentals=0,
        bytes_accessed=elem * (IN * B_pad + OUT * B_pad) + 4 * (OUT * IN + OUT),
    )

    # TODO(synk): on v7x, switch this axis to pltpu.CORE_PARALLEL (or use
    # pl.core_map over create_tensorcore_mesh) so both TensorCores stream
    # halves of the batch; kept "parallel" here for v5e/v6e portability.
    yT = pl.pallas_call(
        _affine_lane_dense_kernel,
        out_shape=jax.ShapeDtypeStruct((OUT, B_pad), xT.dtype),
        grid=(n_tiles,),
        in_specs=[
            pl.BlockSpec((IN, _BATCH_TILE), lambda i: (0, i)),
            pl.BlockSpec((OUT, IN), lambda i: (0, 0)),
            pl.BlockSpec((OUT, 1), lambda i: (0, 0)),
        ],
        out_specs=pl.BlockSpec((OUT, _BATCH_TILE), lambda i: (0, i)),
        compiler_params=pltpu.CompilerParams(
            dimension_semantics=("parallel",),
        ),
        cost_estimate=cost,
    )(xT, w, b_col)
    return yT[:, :B] if B_pad != B else yT


def ctrler_forward(x, w, b_col):
    """Module-facing forward: x (B, IN) -> y (B, OUT) = x @ W^T + b.

    Transposes happen at the boundary only.
    TODO(synk): callers that can keep activations lane-dense ((IN, B)) should
    call ctrler_forward_T directly and skip these wrapper transposes.
    """
    yT = ctrler_forward_T(x.T, w, b_col)
    return yT.T


def init_params(key, in_features=_IN, out_features=_OUT, dtype=jnp.float32):
    """nn.Linear-style init (uniform +/- 1/sqrt(fan_in)).

    Weight stored torch-native as (out, in); bias stored as (out, 1) so the
    lane-dense hot path does zero layout massaging.
    """
    kw, kb = jax.random.split(key)
    bound = 1.0 / jnp.sqrt(jnp.asarray(in_features, dtype))
    w = jax.random.uniform(
        kw, (out_features, in_features), dtype, minval=-bound, maxval=bound
    )
    b_col = jax.random.uniform(
        kb, (out_features, 1), dtype, minval=-bound, maxval=bound
    )
    return w, b_col


if __name__ == "__main__":
    key = jax.random.PRNGKey(0)
    kx, kp, kbig = jax.random.split(key, 3)

    B, IN, OUT = 8, _IN, _OUT
    x = jax.random.normal(kx, (B, IN), dtype=jnp.float32)
    w, b_col = init_params(kp, IN, OUT)

    # Small-batch (grid-less) path — matches the module's forward.
    y = ctrler_forward(x, w, b_col)
    jax.block_until_ready(y)
    y_ref = x @ w.T + b_col.T
    assert y.shape == (B, OUT)
    assert jnp.allclose(y, y_ref, atol=1e-5, rtol=1e-5)

    # Exercise the tiled lane-dense path with a non-multiple-of-tile batch
    # to cover the padding / tail handling as well.
    B_big = 2 * _BATCH_TILE + 37
    x_big = jax.random.normal(kbig, (B_big, IN), dtype=jnp.float32)
    y_big = ctrler_forward(x_big, w, b_col)
    jax.block_until_ready(y_big)
    assert y_big.shape == (B_big, OUT)
    assert jnp.allclose(y_big, x_big @ w.T + b_col.T, atol=1e-4, rtol=1e-4)

    print("KERNEL_OK")
</pallas_src>

<mosaic_0001>
module attributes {stable_mosaic.version = 11 : i64} {
  func.func @_affine_lane_dense_kernel(%arg0: memref<5x8xf32, #tpu.memory_space<vmem>>, %arg1: memref<4x5xf32, #tpu.memory_space<vmem>>, %arg2: memref<4x1xf32, #tpu.memory_space<vmem>>, %arg3: memref<4x8xf32, #tpu.memory_space<vmem>>) attributes {dimension_semantics = [], scalar_prefetch = 0 : i64, scratch_operands = 0 : i64, tpu.core_type = #tpu.core_type<tc>} {
    %c0 = arith.constant 0 : index
    %c0_0 = arith.constant 0 : index
    %0 = vector.load %arg0[%c0, %c0_0] : memref<5x8xf32, #tpu.memory_space<vmem>>, vector<5x8xf32>
    %c0_1 = arith.constant 0 : index
    %c0_2 = arith.constant 0 : index
    %1 = vector.load %arg1[%c0_1, %c0_2] : memref<4x5xf32, #tpu.memory_space<vmem>>, vector<4x5xf32>
    %c0_3 = arith.constant 0 : index
    %c0_4 = arith.constant 0 : index
    %2 = vector.load %arg2[%c0_3, %c0_4] : memref<4x1xf32, #tpu.memory_space<vmem>>, vector<4x1xf32>
    %3 = vector.shape_cast %2 : vector<4x1xf32> to vector<4x1xf32>
    %4 = vector.broadcast %3 : vector<4x1xf32> to vector<4x8xf32>
    %5 = vector.extract_strided_slice %1 {offsets = [0, 0], sizes = [4, 1], strides = [1, 1]} : vector<4x5xf32> to vector<4x1xf32>
    %6 = vector.extract_strided_slice %0 {offsets = [0, 0], sizes = [1, 8], strides = [1, 1]} : vector<5x8xf32> to vector<1x8xf32>
    %7 = vector.broadcast %5 : vector<4x1xf32> to vector<4x8xf32>
    %8 = vector.broadcast %6 : vector<1x8xf32> to vector<4x8xf32>
    %9 = arith.mulf %7, %8 : vector<4x8xf32>
    %10 = arith.addf %4, %9 : vector<4x8xf32>
    %11 = vector.extract_strided_slice %1 {offsets = [0, 1], sizes = [4, 1], strides = [1, 1]} : vector<4x5xf32> to vector<4x1xf32>
    %12 = vector.extract_strided_slice %0 {offsets = [1, 0], sizes = [1, 8], strides = [1, 1]} : vector<5x8xf32> to vector<1x8xf32>
    %13 = vector.broadcast %11 : vector<4x1xf32> to vector<4x8xf32>
    %14 = vector.broadcast %12 : vector<1x8xf32> to vector<4x8xf32>
    %15 = arith.mulf %13, %14 : vector<4x8xf32>
    %16 = arith.addf %10, %15 : vector<4x8xf32>
    %17 = vector.extract_strided_slice %1 {offsets = [0, 2], sizes = [4, 1], strides = [1, 1]} : vector<4x5xf32> to vector<4x1xf32>
    %18 = vector.extract_strided_slice %0 {offsets = [2, 0], sizes = [1, 8], strides = [1, 1]} : vector<5x8xf32> to vector<1x8xf32>
    %19 = vector.broadcast %17 : vector<4x1xf32> to vector<4x8xf32>
    %20 = vector.broadcast %18 : vector<1x8xf32> to vector<4x8xf32>
    %21 = arith.mulf %19, %20 : vector<4x8xf32>
    %22 = arith.addf %16, %21 : vector<4x8xf32>
    %23 = vector.extract_strided_slice %1 {offsets = [0, 3], sizes = [4, 1], strides = [1, 1]} : vector<4x5xf32> to vector<4x1xf32>
    %24 = vector.extract_strided_slice %0 {offsets = [3, 0], sizes = [1, 8], strides = [1, 1]} : vector<5x8xf32> to vector<1x8xf32>
    %25 = vector.broadcast %23 : vector<4x1xf32> to vector<4x8xf32>
    %26 = vector.broadcast %24 : vector<1x8xf32> to vector<4x8xf32>
    %27 = arith.mulf %25, %26 : vector<4x8xf32>
    %28 = arith.addf %22, %27 : vector<4x8xf32>
    %29 = vector.extract_strided_slice %1 {offsets = [0, 4], sizes = [4, 1], strides = [1, 1]} : vector<4x5xf32> to vector<4x1xf32>
    %30 = vector.extract_strided_slice %0 {offsets = [4, 0], sizes = [1, 8], strides = [1, 1]} : vector<5x8xf32> to vector<1x8xf32>
    %31 = vector.broadcast %29 : vector<4x1xf32> to vector<4x8xf32>
    %32 = vector.broadcast %30 : vector<1x8xf32> to vector<4x8xf32>
    %33 = arith.mulf %31, %32 : vector<4x8xf32>
    %34 = arith.addf %28, %33 : vector<4x8xf32>
    %c0_5 = arith.constant 0 : index
    %c0_6 = arith.constant 0 : index
    %35 = vector.load %arg3[%c0_5, %c0_6] : memref<4x8xf32, #tpu.memory_space<vmem>>, vector<4x8xf32>
    tpu.vector_store %arg3[%c0_5, %c0_6], %34 {strides = array<i32>} : memref<4x8xf32, #tpu.memory_space<vmem>>, vector<4x8xf32>,
    return
  }
}

</mosaic_0001>

<llo_original>
// kernel: tpu_custom_call.1
$region0: #{tpu_custom_call.1}
  #allocation0 [shape = 'u32[]', space=smem, size = 0x4, offset = 0x4, fixed_abs, tag = 'smem constant byte address 0x4 - core index']
  #allocation1 [shape = 'u32[72,128]{1,0:T(1,128)}', space=vmem, size = 0x9000, scoped, tag = 'internal scratch']
  %s0 = inlined_call_operand.hbm [shape: f32[5,8], index: 0, kind: input, shape index: {}]
  %s1 = inlined_call_operand.vmem [shape: f32[4,5], index: 1, kind: input, shape index: {}]
  %s2 = inlined_call_operand.vmem [shape: f32[4,1], index: 2, kind: input, shape index: {}]
  %s3 = inlined_call_operand.hbm [shape: f32[4,8], index: 3, kind: output, shape index: {}]
  %s4 = sld [smem:[#allocation0]]
  $region26: #{tpu_custom_call.1} parent=0
    _
  %s6 = ssub.s32 1, %s4
  %s7 = scalar_select 0, %s6, %s4
  $region1: #{tpu_custom_call.1} parent=0
    #allocation2 [shape = 'u8[4096]{0}', space=vmem, size = 0x1000, scoped, tag = 'input window, operand 0, single buffered']
    #allocation3 [shape = 's32[1]{0}', space=sflag, size = 0x4, scoped, tag = 'scoped memory for tpu_custom_call.1']
    #allocation4 [shape = 's32[1]{0}', space=sflag, size = 0x4, scoped, tag = 'scoped memory for tpu_custom_call.1']
    #allocation5 [shape = 'u8[2048]{0}', space=vmem, size = 0x800, scoped, tag = 'output window, operand 0, single buffered']
    %8 = vsyncpa [#allocation3], 0
    %9 = vsyncpa [#allocation4], 0
    // Predicated region
    $region2: #{tpu_custom_call.1} parent=1 // pred_check
      _
    $region3: #{tpu_custom_call.1} parent=1 // pred_check_branch
      %11 = sbr.rel (0) target = $region5
    $region4: #{tpu_custom_call.1} parent=1 // pred_region
      %13 = vsyncadd [#allocation3], 0
      %s15 = sshll.u32 %s0, 4
      %s16 = int_to_ptr.hbm [resolvable:$true] %s15
      %s17 = sshll.u32 [#allocation2], 4
      %s18 = int_to_ptr.vmem [resolvable:$true] %s17
      %20 = dma.hbm_to_vmem [thread:$0]  %s16, 128, %s18, [#allocation3]
    $region5: #{tpu_custom_call.1} parent=1 // pred_fallthru
      _
    // Predicated region
    $region6: #{tpu_custom_call.1} parent=1 // pred_check
      _
    $region7: #{tpu_custom_call.1} parent=1 // pred_check_branch
      %22 = sbr.rel (0) target = $region9
    $region8: #{tpu_custom_call.1} parent=1 // pred_region
      _
    $region9: #{tpu_custom_call.1} parent=1 // pred_fallthru
      _
    // Predicated region
    $region10: #{tpu_custom_call.1} parent=1 // pred_check
      _
    $region11: #{tpu_custom_call.1} parent=1 // pred_check_branch
      %24 = sbr.rel (0) target = $region13
    $region12: #{tpu_custom_call.1} parent=1 // pred_region
      _
    $region13: #{tpu_custom_call.1} parent=1 // pred_fallthru
      _
    // Predicated region
    $region14: #{tpu_custom_call.1} parent=1 // pred_check
      _
    $region15: #{tpu_custom_call.1} parent=1 // pred_check_branch
      %26 = sbr.rel (0) target = $region17
    $region16: #{tpu_custom_call.1} parent=1 // pred_region
      %28 = dma.done [#allocation3], 128
    $region17: #{tpu_custom_call.1} parent=1 // pred_fallthru
      _
    %v29 = vld [vmem:[#allocation2] sm:$0x1f]
    %v30 = vld [vmem:[%s1] sm:$0xf]
    %v31 = vld [vmem:[%s2] sm:$0xf]
    %33 = vset.pattern.permute.xlu0 0
    %34 = vperm.xlu0 %33, %v31
    %v35 = vpop.permute.xlu0 %34
    %38 = vset.pattern.permute.xlu0 0
    %39 = vperm.xlu0 %38, %v30
    %v40 = vpop.permute.xlu0 %39
    %v42 = vperm.slane %v29, 0
    %v43 = vmul.f32 %v40, %v42
    %v44 = vadd.f32 %v35, %v43
    %45 = vset.pattern.permute.xlu0 1
    %46 = vperm.xlu0 %45, %v30
    %v47 = vpop.permute.xlu0 %46
    %v49 = vperm.slane %v29, 1
    %v50 = vmul.f32 %v47, %v49
    %v51 = vadd.f32 %v44, %v50
    %52 = vset.pattern.permute.xlu0 2
    %53 = vperm.xlu0 %52, %v30
    %v54 = vpop.permute.xlu0 %53
    %v56 = vperm.slane %v29, 2
    %v57 = vmul.f32 %v54, %v56
    %v58 = vadd.f32 %v51, %v57
    %59 = vset.pattern.permute.xlu0 3
    %60 = vperm.xlu0 %59, %v30
    %v61 = vpop.permute.xlu0 %60
    %v63 = vperm.slane %v29, 3
    %v64 = vmul.f32 %v61, %v63
    %v65 = vadd.f32 %v58, %v64
    %66 = vset.pattern.permute.xlu0 4
    %67 = vperm.xlu0 %66, %v30
    %v68 = vpop.permute.xlu0 %67
    %v70 = vperm.slane %v29, 4
    %v71 = vmul.f32 %v68, %v70
    %v72 = vadd.f32 %v65, %v71
    %vm73 = vcmask 60416
    %74 = vst.msk [vmem:[#allocation5] sm:$0xf] %vm73, %v72
    // Predicated region
    $region18: #{tpu_custom_call.1} parent=1 // pred_check
      _
    $region19: #{tpu_custom_call.1} parent=1 // pred_check_branch
      %76 = sbr.rel (0) target = $region21
    $region20: #{tpu_custom_call.1} parent=1 // pred_region
      %78 = vsyncadd [#allocation4], 0
      %s80 = sshll.u32 [#allocation5], 4
      %s81 = int_to_ptr.vmem [resolvable:$true] %s80
      %s82 = sshll.u32 %s3, 4
      %s83 = int_to_ptr.hbm [resolvable:$true] %s82
      %85 = dma.vmem_to_hbm [thread:$0]  %s81, 64, %s83, [#allocation4]
    $region21: #{tpu_custom_call.1} parent=1 // pred_fallthru
      _
    // Predicated region
    $region22: #{tpu_custom_call.1} parent=1 // pred_check
      _
    $region23: #{tpu_custom_call.1} parent=1 // pred_check_branch
      %87 = sbr.rel (0) target = $region25
    $region24: #{tpu_custom_call.1} parent=1 // pred_region
      %89 = dma.done [#allocation4], 64
    $region25: #{tpu_custom_call.1} parent=1 // pred_fallthru
      _
    %90 = vsyncpa [#allocation3], 1
    %91 = vsyncpa [#allocation4], 1

</llo_original>
